<compile_context>
chip_gen: v7x
topology: tpu7x:2x2x1
jax: 0.10.0
libtpu: 0.0.40
codegen_flags: <defaults>
</compile_context>

<pallas_src>
import math

import jax
import jax.numpy as jnp
from jax.experimental import pallas as pl
from jax.experimental.pallas import tpu as pltpu


def _round_up(x: int, m: int) -> int:
    return ((x + m - 1) // m) * m


def _make_embed_kernel(tok_block: int, scale: float):
    def embed_kernel(ids_ref, emb_hbm, o_ref, gather_buf, sem):
        # ids_ref:    SMEM (n_tok_pad,) int32 scalar-prefetch token ids (clamped).
        # emb_hbm:    (vocab, d_model_p) raw HBM ref (memory_space=pl.ANY).
        # o_ref:      (tok_block, d_model_p) VMEM output tile.
        # gather_buf: (tok_block, d_model_p) VMEM gather scratch.
        # sem:        single DMA semaphore shared by all row copies of this step.
        base = pl.program_id(0) * tok_block

        # Issue all row-gather DMAs for this token block (all in flight at once).
        @pl.loop(0, tok_block)
        def _issue(t):
            row = ids_ref[base + t]
            pltpu.make_async_copy(
                emb_hbm.at[pl.ds(row, 1)],
                gather_buf.at[pl.ds(t, 1)],
                sem,
            ).start()

        # Wait for all of them. All copies have identical shape and share one
        # semaphore, so one wait per issued copy balances the counts.
        @pl.loop(0, tok_block)
        def _drain(t):
            pltpu.make_async_copy(
                emb_hbm.at[pl.ds(0, 1)],
                gather_buf.at[pl.ds(t, 1)],
                sem,
            ).wait()

        # sqrt(d_model) scaling stays in-kernel (rides otherwise-idle VPU slots);
        # the store is a single lane/sublane-dense slab.
        o_ref[...] = gather_buf[...] * scale

    return embed_kernel


def input_embeddings_pallas(token_ids: jax.Array, emb_table: jax.Array,
                            *, tok_block: int = 256) -> jax.Array:
    """token_ids: (B, S) int; emb_table: (vocab, d_model) -> (B, S, d_model)."""
    B, S = token_ids.shape
    vocab, d_model = emb_table.shape
    n_tok = B * S
    scale = math.sqrt(d_model)  # logical d_model, NOT the padded one

    # Clamp ids so the row-gather DMA can never go out of bounds.
    flat_ids = jnp.clip(token_ids.reshape(n_tok).astype(jnp.int32), 0, vocab - 1)

    # Lane-dense embedding rows: pad d_model up to a multiple of 128.
    d_model_p = _round_up(d_model, 128)
    if d_model_p != d_model:
        emb_table_p = jnp.pad(emb_table, ((0, 0), (0, d_model_p - d_model)))
    else:
        emb_table_p = emb_table

    # Token block: multiple of 8 (sublane-dense output), capped for VMEM.
    tok_block = max(8, min(tok_block, _round_up(n_tok, 8)))
    tok_block = _round_up(tok_block, 8)
    n_tok_pad = _round_up(n_tok, tok_block)
    if n_tok_pad != n_tok:
        flat_ids = jnp.pad(flat_ids, (0, n_tok_pad - n_tok))  # padded ids -> row 0

    grid = (n_tok_pad // tok_block,)

    grid_spec = pltpu.PrefetchScalarGridSpec(
        num_scalar_prefetch=1,                     # flat_ids -> SMEM
        grid=grid,
        in_specs=[
            pl.BlockSpec(memory_space=pl.ANY),     # table stays in HBM, manual DMA
        ],
        out_specs=pl.BlockSpec((tok_block, d_model_p), lambda i, ids: (i, 0)),
        scratch_shapes=[
            pltpu.VMEM((tok_block, d_model_p), emb_table.dtype),
            pltpu.SemaphoreType.DMA(()),
        ],
    )

    out_flat = pl.pallas_call(
        _make_embed_kernel(tok_block, scale),
        grid_spec=grid_spec,
        out_shape=jax.ShapeDtypeStruct((n_tok_pad, d_model_p), emb_table.dtype),
        compiler_params=pltpu.CompilerParams(
            dimension_semantics=("parallel",),     # token blocks are independent
        ),
    )(flat_ids, emb_table_p)

    return out_flat[:n_tok, :d_model].reshape(B, S, d_model)


if __name__ == "__main__":
    # Small, deterministic setup consistent with the module.
    d_model = 32
    vocab_size = 50
    B, S = 2, 8

    key = jax.random.PRNGKey(0)
    k_emb, k_ids = jax.random.split(key)

    # nn.Embedding default init is N(0, 1); replicate deterministically.
    emb_table = jax.random.normal(k_emb, (vocab_size, d_model), dtype=jnp.float32)
    token_ids = jax.random.randint(k_ids, (B, S), 0, vocab_size, dtype=jnp.int32)

    out = input_embeddings_pallas(token_ids, emb_table)
    out = jax.block_until_ready(out)

    # Reference check (plain JAX) to make sure semantics match.
    ref = jnp.take(emb_table, token_ids, axis=0) * math.sqrt(d_model)
    assert out.shape == (B, S, d_model)
    assert jnp.allclose(out, ref, atol=1e-6), "mismatch vs reference embedding"

    print("KERNEL_OK")
</pallas_src>

<mosaic_0001>
module attributes {stable_mosaic.version = 11 : i64} {
  func.func @embed_kernel(%arg0: i32, %arg1: memref<16xi32, #tpu.memory_space<smem>>, %arg2: memref<50x128xf32, #tpu.memory_space<any>>, %arg3: memref<16x128xf32, #tpu.memory_space<vmem>>, %arg4: memref<16x128xf32, #tpu.memory_space<vmem>>, %arg5: memref<!tpu.dma_semaphore, #tpu.memory_space<semaphore_mem>>) attributes {dimension_semantics = [#tpu.dimension_semantics<parallel>], iteration_bounds = array<i64: 1>, scalar_prefetch = 1 : i64, scratch_operands = 2 : i64, tpu.core_type = #tpu.core_type<tc>, window_params = [{}, {transform_indices = @transform_1, window_bounds = array<i64: 16, 128>}]} {
    %c16_i32 = arith.constant 16 : i32
    %0 = arith.muli %arg0, %c16_i32 : i32
    %c0_i32 = arith.constant 0 : i32
    %c16_i32_0 = arith.constant 16 : i32
    %1 = arith.addi %c0_i32, %c16_i32_0 : i32
    %c1_i32 = arith.constant 1 : i32
    scf.for %arg6 = %c0_i32 to %1 step %c1_i32  : i32 {
      %c1_i32_9 = arith.constant 1 : i32
      %7 = arith.muli %arg6, %c1_i32_9 : i32
      %c0_i32_10 = arith.constant 0 : i32
      %8 = arith.addi %c0_i32_10, %7 : i32
      %9 = arith.addi %0, %8 : i32
      %10 = arith.index_cast %9 : i32 to index
      %11 = memref.load %arg1[%10] : memref<16xi32, #tpu.memory_space<smem>>
      %c0_i32_11 = arith.constant 0 : i32
      %12 = tpu.memref_slice %arg2[%11, %c0_i32_11] : memref<50x128xf32, #tpu.memory_space<any>> -> memref<1x128xf32, #tpu.memory_space<any>>
      %c0_i32_12 = arith.constant 0 : i32
      %13 = tpu.memref_slice %arg4[%8, %c0_i32_12] : memref<16x128xf32, #tpu.memory_space<vmem>> -> memref<1x128xf32, #tpu.memory_space<vmem>>
      tpu.enqueue_dma source(%12 : memref<1x128xf32, #tpu.memory_space<any>>) target(%13 : memref<1x128xf32, #tpu.memory_space<vmem>>) target_semaphore(%arg5 : memref<!tpu.dma_semaphore, #tpu.memory_space<semaphore_mem>>)
    }
    %c16_i32_1 = arith.constant 16 : i32
    %c0_i32_2 = arith.constant 0 : i32
    %c16_i32_3 = arith.constant 16 : i32
    %2 = arith.addi %c0_i32_2, %c16_i32_3 : i32
    %c1_i32_4 = arith.constant 1 : i32
    scf.for %arg6 = %c0_i32_2 to %2 step %c1_i32_4  : i32 {
      %c1_i32_9 = arith.constant 1 : i32
      %7 = arith.muli %arg6, %c1_i32_9 : i32
      %c0_i32_10 = arith.constant 0 : i32
      %8 = arith.addi %c0_i32_10, %7 : i32
      %c0_i32_11 = arith.constant 0 : i32
      %c0_i32_12 = arith.constant 0 : i32
      %9 = tpu.memref_slice %arg2[%c0_i32_11, %c0_i32_12] : memref<50x128xf32, #tpu.memory_space<any>> -> memref<1x128xf32, #tpu.memory_space<any>>
      %c0_i32_13 = arith.constant 0 : i32
      %10 = tpu.memref_slice %arg4[%8, %c0_i32_13] : memref<16x128xf32, #tpu.memory_space<vmem>> -> memref<1x128xf32, #tpu.memory_space<vmem>>
      tpu.wait_dma2 semaphore(%arg5 : memref<!tpu.dma_semaphore, #tpu.memory_space<semaphore_mem>>) src(%9 : memref<1x128xf32, #tpu.memory_space<any>>) dst(%10 : memref<1x128xf32, #tpu.memory_space<vmem>>)
    }
    %c16_i32_5 = arith.constant 16 : i32
    %c0 = arith.constant 0 : index
    %c0_6 = arith.constant 0 : index
    %3 = vector.load %arg4[%c0, %c0_6] : memref<16x128xf32, #tpu.memory_space<vmem>>, vector<16x128xf32>
    %cst = arith.constant 5.65685415 : f32
    %4 = vector.broadcast %cst : f32 to vector<16x128xf32>
    %5 = arith.mulf %3, %4 : vector<16x128xf32>
    %c0_7 = arith.constant 0 : index
    %c0_8 = arith.constant 0 : index
    %6 = vector.load %arg3[%c0_7, %c0_8] : memref<16x128xf32, #tpu.memory_space<vmem>>, vector<16x128xf32>
    tpu.vector_store %arg3[%c0_7, %c0_8], %5 {strides = array<i32>} : memref<16x128xf32, #tpu.memory_space<vmem>>, vector<16x128xf32>,
    return
  }
  func.func @transform_1(%arg0: i32, %arg1: memref<16xi32, #tpu.memory_space<smem>>) -> (i32, i32) {
    %c0_i32 = arith.constant 0 : i32
    %c0_i32_0 = arith.constant 0 : i32
    return %arg0, %c0_i32 : i32, i32
  }
}

</mosaic_0001>

<llo_original>
// kernel: tpu_custom_call.1
$region0: #{tpu_custom_call.1}
  #allocation0 [shape = 'u32[]', space=smem, size = 0x4, offset = 0x4, fixed_abs, tag = 'smem constant byte address 0x4 - core index']
  #allocation1 [shape = 'u32[144,128]{1,0:T(1,128)}', space=vmem, size = 0x12000, scoped, tag = 'internal scratch']
  #allocation2 [shape = 'f32[16,128]{1,0:T(8,128)}', space=vmem, size = 0x2000, scoped, tag = 'scratch operand']
  #allocation3 [shape = 's32[1]{0}', space=sflag, size = 0x4, scoped, tag = 'scratch operand']
  #allocation4 [shape = 's32[1]{0}', space=sflag, size = 0x4, scoped, tag = 'scoped memory for tpu_custom_call.1']
  #allocation5 [shape = 'u8[512]{0}', space=smem, size = 0x200, scoped, tag = 'prefetched SMEM operand 0']
  #allocation8 [shape = 's32[]', space=sflag, size = 0x4, offset = 0, fixed_abs, tag = 'sflag constant byte address 0x0 - dummy sync flag']
  #allocation9 [shape = 's32[]', space=sflag, size = 0x4, offset = 0, fixed_abs, tag = 'sflag constant byte address 0x0 - dummy sync flag']
  #allocation10 [shape = 'u32[]', space=smem, size = 0x4, offset = 0x44, fixed_abs, tag = 'smem constant byte address 0x44 - assertion arg 0']
  #allocation11 [shape = 'u32[]', space=smem, size = 0x4, offset = 0x48, fixed_abs, tag = 'smem constant byte address 0x48 - assertion arg 1']
  %s0 = inlined_call_operand.hbm [shape: s32[16], index: 0, kind: input, shape index: {}]
  %s1 = inlined_call_operand.hbm [shape: f32[50,128], index: 1, kind: input, shape index: {}]
  %s2 = inlined_call_operand.hbm [shape: f32[16,128], index: 2, kind: output, shape index: {}]
  %s3 = sld [smem:[#allocation0]]
  $region28: #{tpu_custom_call.1} parent=0
    _
  %s5 = ssub.s32 1, %s3
  %s6 = scalar_select 0, %s5, %s3
  %8 = dma.hbm_to_smem %s0, 16, [#allocation5], [#allocation4]
  %9 = dma.done [#allocation4], 16
  %10 = sfence
  $region1: #{tpu_custom_call.1} parent=0
    #allocation6 [shape = 'u8[8192]{0}', space=vmem, size = 0x2000, scoped, tag = 'output window, operand 0, single buffered']
    #allocation7 [shape = 's32[1]{0}', space=sflag, size = 0x4, scoped, tag = 'scoped memory for tpu_custom_call.1']
    %11 = vsyncpa [#allocation7], 0
    %s12 = smul.u32 0, 16
    loop: start=0, step=1, limit=16
    $region2: #{tpu_custom_call.1} parent=1 // loop_pre_header
      _
    $region3: #{tpu_custom_call.1} parent=1 // loop_header
      %s14 = sphi 0, %s18
      %p15 = scmp.ge.s32.totalorder %s14, 16
    $region4: #{tpu_custom_call.1} parent=1 // loop_header_branch
      %17 = sbr.rel (%p15) target = $region8
    $region5: #{tpu_custom_call.1} parent=1 // loop_body
      %s19 = sadd.s32 %s12, %s14
      %s20 = sld [smem:[#allocation5 + %s19]]
      %s21 = smul.addr %s20, 16
      %s22 = scalar_lea.hbm %s1, %s21
      %s23 = scalar_lea.vmem [#allocation2], %s14
      // Predicated region
      $region9: #{tpu_custom_call.1} parent=5 // pred_check
        _
      $region10: #{tpu_custom_call.1} parent=5 // pred_check_branch
        %25 = sbr.rel target = $region12
      $region11: #{tpu_custom_call.1} parent=5 // pred_region
        %26 = sst [smem:[#allocation10]] [#allocation9]
        %27 = sst [smem:[#allocation11]] [#allocation8]
      $region12: #{tpu_custom_call.1} parent=5 // pred_fallthru
        _
      %29 = shalt.err (0)
      %s31 = sshll.u32 %s23, 4
      %s32 = int_to_ptr.vmem [resolvable:$true] %s31
      %34 = dma.hbm_to_vmem [thread:$0]  %s22, 16, %s32, [#allocation3]
    $region6: #{tpu_custom_call.1} parent=1 // loop_footer
      %s18 = sadd.s32 1, %s14
    $region7: #{tpu_custom_call.1} parent=1 // loop_footer_branch
      %13 = sbr.rel target = $region3
    $region8: #{tpu_custom_call.1} parent=1 // loop_exit
      _
    loop: start=0, step=1, limit=16
    $region13: #{tpu_custom_call.1} parent=1 // loop_pre_header
      _
    $region14: #{tpu_custom_call.1} parent=1 // loop_header
      %s36 = sphi 0, %s40
      %p37 = scmp.ge.s32.totalorder %s36, 16
    $region15: #{tpu_custom_call.1} parent=1 // loop_header_branch
      %39 = sbr.rel (%p37) target = $region19
    $region16: #{tpu_custom_call.1} parent=1 // loop_body
      %s41 = smul.u32 1, 1
      %s42 = sshll.u32 %s41, 4
      %43 = dma.done [#allocation3], %s42
    $region17: #{tpu_custom_call.1} parent=1 // loop_footer
      %s40 = sadd.s32 1, %s36
    $region18: #{tpu_custom_call.1} parent=1 // loop_footer_branch
      %35 = sbr.rel target = $region14
    $region19: #{tpu_custom_call.1} parent=1 // loop_exit
      _
    %v44 = vld [vmem:[#allocation2] sm:$0xff]
    %v45 = vld [vmem:[#allocation2 + $0x8] sm:$0xff]
    %v46 = vmul.f32 %v44, 5.656854
    %v47 = vmul.f32 %v45, 5.656854
    %48 = vst [vmem:[#allocation6] sm:$0xff] %v46
    %49 = vst [vmem:[#allocation6 + $0x8] sm:$0xff] %v47
    // Predicated region
    $region20: #{tpu_custom_call.1} parent=1 // pred_check
      _
    $region21: #{tpu_custom_call.1} parent=1 // pred_check_branch
      %51 = sbr.rel (0) target = $region23
    $region22: #{tpu_custom_call.1} parent=1 // pred_region
      %s53 = ssub.s32 256, 256
      %54 = vsyncadd [#allocation7], %s53
      %s55 = sshll.u32 [#allocation6], 4
      %s56 = int_to_ptr.vmem [resolvable:$true] %s55
      %61 = dma.vmem_to_hbm [thread:$0]  %s56, 256, %s2, [#allocation7], 128, 128, 8
    $region23: #{tpu_custom_call.1} parent=1 // pred_fallthru
      _
    // Predicated region
    $region24: #{tpu_custom_call.1} parent=1 // pred_check
      _
    $region25: #{tpu_custom_call.1} parent=1 // pred_check_branch
      %63 = sbr.rel (0) target = $region27
    $region26: #{tpu_custom_call.1} parent=1 // pred_region
      %64 = dma.done [#allocation7], 256
    $region27: #{tpu_custom_call.1} parent=1 // pred_fallthru
      _
    %65 = vsyncpa [#allocation7], 1
  %66 = vsyncmov [#allocation3]
  %s67 = vpop.sfrf %66
  %p68 = scmp.eq.s32.totalorder %s67, 0
  %p69 = pneg %p68
  %71 = shalt.err (%p69)

</llo_original>
